<compile_context>
chip_gen: v7x
topology: tpu7x:2x2x1
jax: 0.10.0
libtpu: 0.0.40
codegen_flags: <defaults>
</compile_context>

<pallas_src>
import numpy as np
import jax
import jax.numpy as jnp
from jax import lax
from jax.experimental import pallas as pl
from jax.experimental.pallas import tpu as pltpu


# --------------------------------------------------------------------- kernel
def _compose_kernel(bounds_ref, x_ref, o_ref):
    """Segmented mean over token positions as one batched MXU matmul.

    bounds_ref : VMEM f32 (TB, S, 3)  [...,0]=start, [...,1]=end (half-open),
                                      [...,2]=1/segment_len (0 for empty/pad)
    x_ref      : VMEM f32|bf16 (TB, L, D)  hidden states (native dtype)
    o_ref      : VMEM f32 (TB, S, D)  per-segment means
    """
    tb, s, _ = bounds_ref.shape
    l = x_ref.shape[1]
    b = bounds_ref[...]                               # one load, then lane slices
    start = b[:, :, 0:1]
    end = b[:, :, 1:2]
    inv = b[:, :, 2:3]
    # Positions as exact small integers in f32; compare/select stays on the f32
    # VALU path (v5e has no bf16 VALU).  Only the matmul operand is cast down.
    pos = lax.broadcasted_iota(jnp.int32, (tb, s, l), 2).astype(jnp.float32)
    w = jnp.where((pos >= start) & (pos < end), inv, 0.0)          # (TB,S,L) f32
    o_ref[...] = jnp.einsum(
        "tsl,tld->tsd", w.astype(x_ref.dtype), x_ref[...],
        preferred_element_type=jnp.float32).astype(o_ref.dtype)


# ------------------------------------------------------------------ host glue
def _round_up(a, m):
    return -(-a // m) * m


def _segment_bounds(col_ids, comma_id, L):
    """Vectorized segment boundaries, mirroring the torch loop's convention:
    segment j = [prev_comma_pos (or 0), comma_pos_j - 1); trailing segment runs
    to the end of the sequence.  Returns starts, ends (B,S) int32, inv (B,S) f32."""
    col = np.asarray(col_ids)
    B = col.shape[0]
    is_comma = (col == comma_id)
    n_commas = is_comma.sum(axis=1).astype(np.int32)                  # (B,)
    S = int(n_commas.max()) + 1
    max_c = S - 1
    if max_c > 0:
        # stable argsort puts comma positions first, in increasing order
        ppos = np.argsort(~is_comma, axis=1, kind="stable")[:, :max_c].astype(np.int32)
    else:
        ppos = np.zeros((B, 0), np.int32)

    j = np.arange(S, dtype=np.int32)[None, :]                         # (1,S)
    nc = n_commas[:, None]                                            # (B,1)
    prev = np.concatenate([np.zeros((B, 1), np.int32), ppos], axis=1) # (B,S)
    cur = np.concatenate([ppos, np.zeros((B, 1), np.int32)], axis=1)  # (B,S)

    starts = np.where(j <= nc, prev, 0).astype(np.int32)
    ends = np.where(j < nc, cur - 1,
                    np.where(j == nc, L, 0)).astype(np.int32)
    cnt = ends - starts
    # Degenerate/empty/pad segments get weight 0 (output 0); torch would NaN.
    inv = np.where(cnt > 0, 1.0 / np.maximum(cnt, 1), 0.0).astype(np.float32)
    return starts, ends, inv, S


_VMEM_CACHE = None


def _vmem_budget_and_limit():
    """Generation-aware VMEM budget for blocks+temporaries and an explicit
    scoped-VMEM limit (v7x: 64 MiB physical; v5e/v6e: 128 MiB, 16/32 MiB default
    scoped).  Conservative fallback if the query is unavailable."""
    global _VMEM_CACHE
    if _VMEM_CACHE is None:
        try:
            cap = int(pltpu.get_tpu_info().vmem_capacity_bytes)
            cap = max(32 * 2**20, min(cap, 128 * 2**20))
        except Exception:
            cap = 64 * 2**20          # conservative: v7x per-core physical VMEM
        budget = min(int(cap * 0.45), 56 * 2**20)
        limit = min(int(cap * 0.85), 100 * 2**20)
        _VMEM_CACHE = (budget, limit)
    return _VMEM_CACHE


def _choose_tb(B, L, S, D, x_bytes, vmem_budget):
    """Rows per grid step: as many as fit the budget, counting double-buffered
    BlockSpec buffers, lane/sublane padding AND the in-kernel temporaries."""
    s8 = _round_up(S, 8)
    l8 = _round_up(L, 8)
    l128 = _round_up(L, 128)
    d128 = _round_up(D, 128)
    per_row = (
        2 * l8 * d128 * x_bytes      # x block (double-buffered, native dtype)
        + 2 * s8 * 128 * 4           # packed bounds block, lane-padded (double-buffered)
        + 2 * s8 * d128 * 4          # output block (double-buffered, f32)
        + 3 * s8 * l128 * 4          # in-kernel temporaries: iota, mask, W
        + 1 * s8 * d128 * 4          # einsum result before store
    )
    tb = max(1, int(vmem_budget) // max(per_row, 1))
    tb = min(tb, B)
    if tb >= B and B >= 2:
        # Keep the grid >= 2 only when one block would cover the whole batch:
        # both v7x TensorCores get work; on 1-TC chips this costs at most one
        # extra ~0.35us step.
        tb = -(-B // 2)
    return max(1, int(tb))


def compose_outputs_pallas(col_input_ids, final_vector, comma_id, multi=False):
    """JAX/Pallas equivalent of WikiSQLBase.compose_outputs (output f32)."""
    fv = jnp.asarray(final_vector)
    if fv.dtype not in (jnp.float32, jnp.bfloat16):
        fv = fv.astype(jnp.float32)
    if fv.ndim == 1 or (multi and fv.ndim == 2):
        fv = fv[None]
    col = np.atleast_2d(np.asarray(col_input_ids))     # tokenizer output lives on host
    B = col.shape[0]
    L = int(fv.shape[1])

    starts, ends, inv, S = _segment_bounds(col, comma_id, L)

    if not multi:
        # D == 1: a Pallas kernel would run at ~1/128 lane utilization.
        pos = jnp.arange(L, dtype=jnp.int32)[None, None, :]
        w = jnp.where((pos >= jnp.asarray(starts)[:, :, None]) &
                      (pos < jnp.asarray(ends)[:, :, None]),
                      jnp.asarray(inv)[:, :, None], 0.0)              # (B,S,L)
        return jnp.einsum("bsl,bl->bs", w, fv.astype(jnp.float32))

    D = int(fv.shape[2])
    x_bytes = int(fv.dtype.itemsize)
    budget, vmem_limit = _vmem_budget_and_limit()
    TB = _choose_tb(B, L, S, D, x_bytes, budget)
    n_blocks = -(-B // TB)
    B_pad = n_blocks * TB

    # Pad ONLY the tiny host-side bounds (inv=0 -> pad rows output 0); the
    # (B, L, D) activations are NOT padded — the last block's ragged read is
    # handled by Pallas boundary masking and its rows are sliced off below.
    bounds = np.zeros((B_pad, S, 3), np.float32)
    bounds[:B, :, 0] = starts
    bounds[:B, :, 1] = ends
    bounds[:B, :, 2] = inv
    bounds_d = jnp.asarray(bounds)

    cost = pl.CostEstimate(
        flops=int(2 * B * S * L * D),
        transcendentals=0,
        bytes_accessed=int(B * L * D * x_bytes + B * S * 3 * 4 + B * S * D * 4))

    grid_spec = pltpu.PrefetchScalarGridSpec(
        num_scalar_prefetch=0,
        grid=(n_blocks,),
        in_specs=[
            pl.BlockSpec((TB, S, 3), lambda i: (i, 0, 0)),
            pl.BlockSpec((TB, L, D), lambda i: (i, 0, 0)),
        ],
        out_specs=pl.BlockSpec((TB, S, D), lambda i: (i, 0, 0)),
    )
    out = pl.pallas_call(
        _compose_kernel,
        out_shape=jax.ShapeDtypeStruct((B_pad, S, D), jnp.float32),
        grid_spec=grid_spec,
        compiler_params=pltpu.CompilerParams(
            dimension_semantics=("parallel",),
            vmem_limit_bytes=vmem_limit),
        cost_estimate=cost,
    )(bounds_d, fv)
    return out[:B]


# ---------------------------------------------------------------- module port
class WikiSQLBasePallas:
    """Minimal JAX port of WikiSQLBase; forward() is a no-op in the original."""

    def __init__(self, base_model_type="bert", attention_type="cross",
                 col_drop=False, heads=(True, True, True)):
        # nn.Parameter(torch.empty((1, 1))) -> deterministic init, unused in compute.
        self.parameter = jnp.zeros((1, 1), jnp.float32)
        self.base_model = "gpt" if "gpt" in base_model_type else "bert"
        self.attention_type = attention_type
        self.col_drop = col_drop
        self.sel_head, self.agg_head, self.cond_head = heads

    def forward(self, data):
        # TODO(synk): forward() is `pass` in the reference module (subclasses define it).
        return None

    def compose_outputs(self, col_vector, final_vector, comma_id, multi=False):
        # comma_id replaces self.tokenizer.convert_tokens_to_ids(',') — string
        # glue (tokenizer, unpack) stays on the host.
        return compose_outputs_pallas(col_vector["input_ids"], final_vector,
                                      comma_id, multi=multi)

    @staticmethod
    def reduce_col_name(columns):
        # Pure-Python string processing (no Pallas equivalent needed).
        if isinstance(columns, list):
            return [" ".join(c.split()[0] for c in cols.split(",")).strip()
                    for cols in columns]
        return " ".join(c.split()[0] for c in columns.split(",")).strip()


# ------------------------------------------------------------------ reference
def _reference_compose(col, fv, comma_id, S):
    """Pure-numpy mirror of the torch loop in compose_outputs (multi=True)."""
    col = np.asarray(col)
    fv = np.asarray(fv)
    B, L, D = fv.shape
    out = np.zeros((B, S, D), np.float32)
    for b in range(B):
        ps = np.nonzero(col[b] == comma_id)[0]
        s = 0
        for j, p in enumerate(ps):
            out[b, j] = fv[b, s:p - 1].mean(axis=0)
            s = int(p)
        out[b, len(ps)] = fv[b, s:].mean(axis=0)
    return out


if __name__ == "__main__":
    key = jax.random.PRNGKey(0)
    B, L, D = 4, 16, 128
    COMMA = 5  # synthetic ',' token id

    # Synthetic tokenized column ids ("col a , col b , ..."), varying comma counts.
    col_ids = np.full((B, L), 7, dtype=np.int32)
    col_ids[0, [4, 9, 14]] = COMMA
    col_ids[1, [6, 12]] = COMMA
    col_ids[2, [3, 7, 11]] = COMMA
    col_ids[3, [8]] = COMMA

    final_vector = jax.random.normal(key, (B, L, D), dtype=jnp.float32)

    model = WikiSQLBasePallas("bert")

    # multi path, f32 (Pallas kernel)
    out = model.compose_outputs({"input_ids": col_ids}, final_vector, COMMA, multi=True)
    out = jax.block_until_ready(out)
    S = int((col_ids == COMMA).sum(axis=1).max()) + 1
    ref = _reference_compose(col_ids, np.asarray(final_vector), COMMA, S)
    assert out.shape == (B, S, D), out.shape
    assert out.dtype == jnp.float32
    assert np.allclose(np.asarray(out), ref, atol=1e-5, rtol=1e-5)

    # ragged batch (B=3 does not divide the 2-row blocks): exercises the
    # no-activation-padding path with a boundary block on the last grid step.
    out3 = jax.block_until_ready(
        model.compose_outputs({"input_ids": col_ids[:3]}, final_vector[:3], COMMA, multi=True))
    S3 = int((col_ids[:3] == COMMA).sum(axis=1).max()) + 1
    ref3 = _reference_compose(col_ids[:3], np.asarray(final_vector[:3]), COMMA, S3)
    assert out3.shape == (3, S3, D), out3.shape
    assert np.allclose(np.asarray(out3), ref3, atol=1e-5, rtol=1e-5)

    # bf16 activations: HBM traffic halved, MXU-native inputs (looser tolerance).
    out_bf = jax.block_until_ready(
        model.compose_outputs({"input_ids": col_ids},
                              final_vector.astype(jnp.bfloat16), COMMA, multi=True))
    assert out_bf.dtype == jnp.float32
    assert np.allclose(np.asarray(out_bf), ref, atol=5e-2, rtol=5e-2)

    # non-multi path (D == 1; plain-XLA by design — lane width 1 in a kernel is waste)
    fv1 = jax.random.normal(jax.random.PRNGKey(1), (B, L), dtype=jnp.float32)
    out1 = jax.block_until_ready(
        model.compose_outputs({"input_ids": col_ids}, fv1, COMMA, multi=False))
    ref1 = _reference_compose(col_ids, np.asarray(fv1)[:, :, None], COMMA, S)[:, :, 0]
    assert out1.shape == (B, S), out1.shape
    assert np.allclose(np.asarray(out1), ref1, atol=1e-5, rtol=1e-5)

    print("KERNEL_OK")
</pallas_src>

<mosaic_0001>
module attributes {stable_mosaic.version = 11 : i64} {
  func.func @_compose_kernel(%arg0: i32, %arg1: memref<2x4x3xf32, #tpu.memory_space<vmem>>, %arg2: memref<2x16x128xf32, #tpu.memory_space<vmem>>, %arg3: memref<2x4x128xf32, #tpu.memory_space<vmem>>) attributes {dimension_semantics = [#tpu.dimension_semantics<parallel>], iteration_bounds = array<i64: 2>, scalar_prefetch = 0 : i64, scratch_operands = 0 : i64, tpu.core_type = #tpu.core_type<tc>, window_params = [{transform_indices = @transform_0, window_bounds = array<i64: 2, 4, 3>}, {transform_indices = @transform_1, window_bounds = array<i64: 2, 16, 128>}, {transform_indices = @transform_2, window_bounds = array<i64: 2, 4, 128>}]} {
    %c0 = arith.constant 0 : index
    %c0_0 = arith.constant 0 : index
    %c0_1 = arith.constant 0 : index
    %0 = vector.load %arg1[%c0, %c0_0, %c0_1] : memref<2x4x3xf32, #tpu.memory_space<vmem>>, vector<2x4x3xf32>
    %1 = vector.extract_strided_slice %0 {offsets = [0, 0, 0], sizes = [2, 4, 1], strides = [1, 1, 1]} : vector<2x4x3xf32> to vector<2x4x1xf32>
    %2 = vector.extract_strided_slice %0 {offsets = [0, 0, 1], sizes = [2, 4, 1], strides = [1, 1, 1]} : vector<2x4x3xf32> to vector<2x4x1xf32>
    %3 = vector.extract_strided_slice %0 {offsets = [0, 0, 2], sizes = [2, 4, 1], strides = [1, 1, 1]} : vector<2x4x3xf32> to vector<2x4x1xf32>
    %4 = tpu.iota {dimensions = array<i32: 2>} : vector<2x4x16xi32>
    %5 = arith.sitofp %4 : vector<2x4x16xi32> to vector<2x4x16xf32>
    %6 = vector.broadcast %1 : vector<2x4x1xf32> to vector<2x4x16xf32>
    %7 = arith.cmpf oge, %5, %6 : vector<2x4x16xf32>
    %8 = vector.broadcast %2 : vector<2x4x1xf32> to vector<2x4x16xf32>
    %9 = arith.cmpf olt, %5, %8 : vector<2x4x16xf32>
    %10 = arith.andi %7, %9 : vector<2x4x16xi1>
    %cst = arith.constant 0.000000e+00 : f32
    %11 = vector.shape_cast %3 : vector<2x4x1xf32> to vector<2x4x1xf32>
    %12 = vector.broadcast %11 : vector<2x4x1xf32> to vector<2x4x16xf32>
    %13 = vector.broadcast %cst : f32 to vector<2x4x16xf32>
    %14 = arith.select %10, %12, %13 : vector<2x4x16xi1>, vector<2x4x16xf32>
    %c0_2 = arith.constant 0 : index
    %c0_3 = arith.constant 0 : index
    %c0_4 = arith.constant 0 : index
    %15 = vector.load %arg2[%c0_2, %c0_3, %c0_4] : memref<2x16x128xf32, #tpu.memory_space<vmem>>, vector<2x16x128xf32>
    "tpu.trace_start"() <{level = 10 : i32, message = "tsl,tld->tsd"}> : () -> ()
    %cst_5 = arith.constant dense<0.000000e+00> : vector<2x4x128xf32>
    %16 = tpu.matmul %14, %15, %cst_5 {dimension_numbers = #tpu.dot_dimension_numbers<[2], [1], [1], [2], [0, 0, 0, 1, 1, 2], [0], [0]>} : vector<2x4x16xf32>, vector<2x16x128xf32>, vector<2x4x128xf32> -> vector<2x4x128xf32>
    "tpu.trace_stop"() : () -> ()
    %c0_6 = arith.constant 0 : index
    %c0_7 = arith.constant 0 : index
    %c0_8 = arith.constant 0 : index
    %17 = vector.load %arg3[%c0_6, %c0_7, %c0_8] : memref<2x4x128xf32, #tpu.memory_space<vmem>>, vector<2x4x128xf32>
    tpu.vector_store %arg3[%c0_6, %c0_7, %c0_8], %16 {strides = array<i32>} : memref<2x4x128xf32, #tpu.memory_space<vmem>>, vector<2x4x128xf32>,
    return
  }
  func.func @transform_0(%arg0: i32) -> (i32, i32, i32) {
    %c0_i32 = arith.constant 0 : i32
    %c0_i32_0 = arith.constant 0 : i32
    %c0_i32_1 = arith.constant 0 : i32
    return %arg0, %c0_i32, %c0_i32_0 : i32, i32, i32
  }
  func.func @transform_1(%arg0: i32) -> (i32, i32, i32) {
    %c0_i32 = arith.constant 0 : i32
    %c0_i32_0 = arith.constant 0 : i32
    %c0_i32_1 = arith.constant 0 : i32
    return %arg0, %c0_i32, %c0_i32_0 : i32, i32, i32
  }
  func.func @transform_2(%arg0: i32) -> (i32, i32, i32) {
    %c0_i32 = arith.constant 0 : i32
    %c0_i32_0 = arith.constant 0 : i32
    %c0_i32_1 = arith.constant 0 : i32
    return %arg0, %c0_i32, %c0_i32_0 : i32, i32, i32
  }
}

</mosaic_0001>

<llo_original>
// kernel: tpu_custom_call.1
$region0: #{tpu_custom_call.1}
  #allocation0 [shape = 'u32[]', space=smem, size = 0x4, offset = 0x4, fixed_abs, tag = 'smem constant byte address 0x4 - core index']
  #allocation1 [shape = 'u32[144,128]{1,0:T(1,128)}', space=vmem, size = 0x12000, scoped, tag = 'internal scratch']
  %s0 = inlined_call_operand.vmem [shape: f32[4,4,3], index: 0, kind: input, shape index: {}]
  %s1 = inlined_call_operand.hbm [shape: f32[4,16,128], index: 1, kind: input, shape index: {}]
  %s2 = inlined_call_operand.hbm [shape: f32[4,4,128], index: 2, kind: output, shape index: {}]
  %s3 = sld [smem:[#allocation0]]
  $region45: #{tpu_custom_call.1} parent=0
    _
  %s5 = ssub.s32 1, %s3
  %s6 = scalar_select 0, %s5, %s3
  $region1: #{tpu_custom_call.1} parent=0
    #allocation2 [shape = 'u8[32768]{0}', space=vmem, size = 0x8000, scoped, tag = 'input window, operand 1']
    #allocation3 [shape = 's32[2]{0}', space=sflag, size = 0x8, scoped, tag = 'scoped memory for tpu_custom_call.1']
    #allocation4 [shape = 's32[2]{0}', space=sflag, size = 0x8, scoped, tag = 'scoped memory for tpu_custom_call.1']
    #allocation5 [shape = 'u8[8192]{0}', space=vmem, size = 0x2000, scoped, tag = 'output window, operand 0']
    %7 = vsyncpa [#allocation3], 0
    %s8 = scalar_lea.sflag [#allocation3], 1
    %9 = vsyncpa %s8, 0
    %10 = vsyncpa [#allocation4], 0
    %s11 = scalar_lea.sflag [#allocation4], 1
    %12 = vsyncpa %s11, 0
    loop: start=0, step=1, limit=4
    $region2: #{tpu_custom_call.1} parent=1 // loop_pre_header
      _
    $region3: #{tpu_custom_call.1} parent=1 // loop_header
      %s14 = sphi 0, %s18
      %p15 = scmp.ge.s32.totalorder %s14, 4
      %s24 = sphi 0, %s26
      %s27 = sphi 0, %s24
      %s28 = sphi 0, %s27
      %s44 = sphi 0, %s28
      %s50 = sphi 0, %s52
      %s53 = sphi 0, %s50
      %s54 = sphi 0, %s53
      %s70 = sphi 0, %s54
      %s76 = sphi 0, %s78
      %s79 = sphi 0, %s76
      %s80 = sphi 0, %s79
      %s96 = sphi 0, %s80
    $region4: #{tpu_custom_call.1} parent=1 // loop_header_branch
      %17 = sbr.rel (%p15) target = $region8
    $region5: #{tpu_custom_call.1} parent=1 // loop_body
      %s19 = ssub.s32 %s14, 1
      %s20 = ssub.s32 %s14, 2
      %s21 = sadd.s32 %s14, 1
      %s22 = ssub.s32 %s14, %s21
      %p23 = scmp.eq.s32.totalorder %s22, 0
      %s25 = sadd.s32 %s24, 1
      %s26 = scalar_select %p23, %s24, %s25
      %p29 = pneg %p23
      %p30 = scmp.eq.s32.totalorder %s14, 1
      %p31 = por %p29, %p30
      %p32 = scmp.ne.s32.totalorder %s24, %s27
      %p33 = scmp.eq.s32.totalorder %s14, 0
      %p34 = por %p32, %p33
      %p35 = scmp.ne.s32.totalorder %s24, %s27
      %p36 = scmp.eq.s32.totalorder %s19, 1
      %p37 = por %p35, %p36
      %p38 = scmp.ne.s32.totalorder %s27, %s28
      %p39 = scmp.eq.s32.totalorder %s19, 0
      %p40 = por %p38, %p39
      %p41 = scmp.ne.s32.totalorder %s27, %s28
      %p42 = scmp.eq.s32.totalorder %s20, 1
      %p43 = por %p41, %p42
      %p45 = scmp.ne.s32.totalorder %s28, %s44
      %p46 = scmp.eq.s32.totalorder %s20, 0
      %p47 = por %p45, %p46
      %s48 = ssub.s32 %s14, %s21
      %p49 = scmp.eq.s32.totalorder %s48, 0
      %s51 = sadd.s32 %s50, 1
      %s52 = scalar_select %p49, %s50, %s51
      %p55 = pneg %p49
      %p56 = scmp.eq.s32.totalorder %s14, 1
      %p57 = por %p55, %p56
      %p58 = scmp.ne.s32.totalorder %s50, %s53
      %p59 = scmp.eq.s32.totalorder %s14, 0
      %p60 = por %p58, %p59
      %p61 = scmp.ne.s32.totalorder %s50, %s53
      %p62 = scmp.eq.s32.totalorder %s19, 1
      %p63 = por %p61, %p62
      %p64 = scmp.ne.s32.totalorder %s53, %s54
      %p65 = scmp.eq.s32.totalorder %s19, 0
      %p66 = por %p64, %p65
      %p67 = scmp.ne.s32.totalorder %s53, %s54
      %p68 = scmp.eq.s32.totalorder %s20, 1
      %p69 = por %p67, %p68
      %p71 = scmp.ne.s32.totalorder %s54, %s70
      %p72 = scmp.eq.s32.totalorder %s20, 0
      %p73 = por %p71, %p72
      %s74 = ssub.s32 %s14, %s21
      %p75 = scmp.eq.s32.totalorder %s74, 0
      %s77 = sadd.s32 %s76, 1
      %s78 = scalar_select %p75, %s76, %s77
      %p81 = pneg %p75
      %p82 = scmp.eq.s32.totalorder %s14, 1
      %p83 = por %p81, %p82
      %p84 = scmp.ne.s32.totalorder %s76, %s79
      %p85 = scmp.eq.s32.totalorder %s14, 0
      %p86 = por %p84, %p85
      %p87 = scmp.ne.s32.totalorder %s76, %s79
      %p88 = scmp.eq.s32.totalorder %s19, 1
      %p89 = por %p87, %p88
      %p90 = scmp.ne.s32.totalorder %s79, %s80
      %p91 = scmp.eq.s32.totalorder %s19, 0
      %p92 = por %p90, %p91
      %p93 = scmp.ne.s32.totalorder %s79, %s80
      %p94 = scmp.eq.s32.totalorder %s20, 1
      %p95 = por %p93, %p94
      %p97 = scmp.ne.s32.totalorder %s80, %s96
      %p98 = scmp.eq.s32.totalorder %s20, 0
      %p99 = por %p97, %p98
      %p100 = scmp.le.s32.totalorder 1, %s14
      %p101 = scmp.lt.s32.totalorder %s14, 3
      %p102 = pnand %p100, %p101
      %p103 = pneg %p102
      // Predicated region
      $region9: #{tpu_custom_call.1} parent=5 // pred_check
        _
      $region10: #{tpu_custom_call.1} parent=5 // pred_check_branch
        %105 = sbr.rel (%p102) target = $region12
      $region11: #{tpu_custom_call.1} parent=5 // pred_region
        %s106 = ssub.s32 %s14, 1
      $region12: #{tpu_custom_call.1} parent=5 // pred_fallthru
        _
      %p107 = scmp.lt.s32.totalorder %s14, 2
      // Predicated region
      $region13: #{tpu_custom_call.1} parent=5 // pred_check
        %p108 = pneg %p107
      $region14: #{tpu_custom_call.1} parent=5 // pred_check_branch
        %110 = sbr.rel (%p108) target = $region16
      $region15: #{tpu_custom_call.1} parent=5 // pred_region
        // Predicated region
        $region17: #{tpu_custom_call.1} parent=15 // pred_check
          %p111 = pneg %p34
        $region18: #{tpu_custom_call.1} parent=15 // pred_check_branch
          %113 = sbr.rel (%p111) target = $region20
        $region19: #{tpu_custom_call.1} parent=15 // pred_region
          %s114 = smul.u32 2, %s14
          %p115 = scmp.lt.s32.totalorder %s114, 3
          %s116 = scalar_select %p115, %s114, 3
          %s117 = smul.addr %s116, 4
          %s118 = scalar_lea.vmem %s0, %s117
          %s119 = smul.u32 2, %s14
        $region20: #{tpu_custom_call.1} parent=15 // pred_fallthru
          _
        // Predicated region
        $region21: #{tpu_custom_call.1} parent=15 // pred_check
          %p120 = pneg %p60
        $region22: #{tpu_custom_call.1} parent=15 // pred_check_branch
          %122 = sbr.rel (%p120) target = $region24
        $region23: #{tpu_custom_call.1} parent=15 // pred_region
          %s123 = sand.u32 %s50, 1
          %s124 = scalar_lea.sflag [#allocation3], %s123
          %s125 = sand.u32 %s50, 1
          %s126 = smul.addr %s125, 32
          %s127 = scalar_lea.vmem [#allocation2], %s126
          %s128 = smul.u32 2, %s14
          %s130 = ssub.s32 512, 512
          %131 = vsyncadd %s124, %s130
          %s132 = smul.addr %s128, 2
          %s133 = smul.addr %s132, 128
          %s134 = scalar_lea.hbm %s1, %s133
          %s135 = sshll.u32 %s127, 4
          %s136 = int_to_ptr.vmem [resolvable:$true] %s135
          %141 = dma.hbm_to_vmem [thread:$0]  %s134, 512, %s136, %s124, 128, 128, 8
        $region24: #{tpu_custom_call.1} parent=15 // pred_fallthru
          _
      $region16: #{tpu_custom_call.1} parent=5 // pred_fallthru
        _
      %p142 = scmp.le.s32.totalorder 1, %s14
      %p143 = scmp.lt.s32.totalorder %s14, 3
      %p144 = pnand %p142, %p143
      %p145 = pneg %p144
      // Predicated region
      $region25: #{tpu_custom_call.1} parent=5 // pred_check
        _
      $region26: #{tpu_custom_call.1} parent=5 // pred_check_branch
        %147 = sbr.rel (%p144) target = $region28
      $region27: #{tpu_custom_call.1} parent=5 // pred_region
        %s148 = ssub.s32 %s14, 1
        %s149 = sand.u32 %s53, 1
        %s150 = scalar_lea.sflag [#allocation3], %s149
        %s151 = sand.u32 %s53, 1
        %s152 = smul.addr %s151, 32
        %s153 = scalar_lea.vmem [#allocation2], %s152
        // Predicated region
        $region29: #{tpu_custom_call.1} parent=27 // pred_check
          %p154 = pneg %p66
        $region30: #{tpu_custom_call.1} parent=27 // pred_check_branch
          %156 = sbr.rel (%p154) target = $region32
        $region31: #{tpu_custom_call.1} parent=27 // pred_region
          %157 = dma.done %s150, 512
        $region32: #{tpu_custom_call.1} parent=27 // pred_fallthru
          _
        %s158 = smul.u32 2, %s19
        %p159 = scmp.lt.s32.totalorder %s158, 3
        %s160 = scalar_select %p159, %s158, 3
        %s161 = smul.addr %s160, 4
        %s162 = scalar_lea.vmem %s0, %s161
        %p163 = pneg %p40
        %p164 = pneg %p37
        %s165 = sand.u32 %s53, 1
        %s166 = scalar_lea.sflag [#allocation3], %s165
        %s167 = sand.u32 %s53, 1
        %s168 = smul.addr %s167, 32
        %s169 = scalar_lea.vmem [#allocation2], %s168
        %p170 = pneg %p66
        %p171 = pneg %p63
        %p172 = pneg %p92
        %p173 = pneg %p89
        %s174 = sand.u32 %s79, 1
        %s175 = scalar_lea.sflag [#allocation4], %s174
        %s176 = sand.u32 %s79, 1
        %s177 = smul.addr %s176, 8
        %s178 = scalar_lea.vmem [#allocation5], %s177
        %s179 = smul.u32 2, %s19
        %p180 = scmp.lt.s32.totalorder %s179, 3
        %s181 = scalar_select %p180, %s179, 3
        %s182 = smul.addr %s181, 4
        %s183 = scalar_lea.vmem %s0, %s182
        %s184 = smul.u32 2, %s19
        %s185 = smul.u32 2, %s19
        %s186 = smul.u32 2, %s19
        %v187 = vld [vmem:[%s183] sm:$0xf]
        %v188 = vld [vmem:[%s183 + $0x4] sm:$0xf]
        %v189 = vlaneseq
        %v190 = vand.u32 %v189, 127
        %v191 = vcvt.s32.f32 %v190
        %193 = vset.pattern.permute.xlu0 0
        %194 = vperm.xlu0 %193, %v187
        %v195 = vpop.permute.xlu0 %194
        %198 = vset.pattern.permute.xlu0 0
        %199 = vperm.xlu0 %198, %v188
        %v200 = vpop.permute.xlu0 %199
        %vm202 = vcmp.ge.f32.partialorder %v191, %v195
        %vm203 = vcmp.ge.f32.partialorder %v191, %v200
        %204 = vset.pattern.permute.xlu0 1
        %205 = vperm.xlu0 %204, %v187
        %v206 = vpop.permute.xlu0 %205
        %208 = vset.pattern.permute.xlu0 1
        %209 = vperm.xlu0 %208, %v188
        %v210 = vpop.permute.xlu0 %209
        %vm212 = vcmp.lt.f32.partialorder %v191, %v206
        %vm213 = vcmp.lt.f32.partialorder %v191, %v210
        %vm214 = vmand %vm202, %vm212
        %vm215 = vmand %vm203, %vm213
        %216 = vset.pattern.permute.xlu0 2
        %217 = vperm.xlu0 %216, %v187
        %v218 = vpop.permute.xlu0 %217
        %220 = vset.pattern.permute.xlu0 2
        %221 = vperm.xlu0 %220, %v188
        %v222 = vpop.permute.xlu0 %221
        %v224 = vsel %vm214, %v218, 0.0
        %v225 = vsel %vm215, %v222, 0.0
        %v226 = vld [vmem:[%s153] sm:$0xff]
        %v227 = vld [vmem:[%s153 + $0x8] sm:$0xff]
        %v228 = vld [vmem:[%s153 + $0x10] sm:$0xff]
        %v229 = vld [vmem:[%s153 + $0x18] sm:$0xff]
        %vm230 = vcmask 130048
        %v232 = vsel %vm230, %v224, 0
        %234 = vmatprep.subr.mxu0 0.0
        %235 = vmatpush1.msra.mxu0 %v226
        %236 = vmatprep.subr.mxu0 0.0
        %237 = vmatpush1.msra.mxu0 %v227
        %238 = vmatprep.subr.mxu0 0.0
        %239 = vmatpush1.msra.mxu0 0.0
        %240 = vmatprep.subr.mxu0 0.0
        %241 = vmatpush1.msra.mxu0 0.0
        %242 = vmatprep.subr.mxu0 0.0
        %243 = vmatpush1.msra.mxu0 0.0
        %244 = vmatprep.subr.mxu0 0.0
        %245 = vmatpush1.msra.mxu0 0.0
        %246 = vmatprep.subr.mxu0 0.0
        %247 = vmatpush1.msra.mxu0 0.0
        %248 = vmatprep.subr.mxu0 0.0
        %249 = vmatpush1.msra.mxu0 0.0
        %250 = vmatprep.subr.mxu0 0.0
        %251 = vmatpush1.msra.mxu0 0.0
        %252 = vmatprep.subr.mxu0 0.0
        %253 = vmatpush1.msra.mxu0 0.0
        %254 = vmatprep.subr.mxu0 0.0
        %255 = vmatpush1.msra.mxu0 0.0
        %256 = vmatprep.subr.mxu0 0.0
        %257 = vmatpush1.msra.mxu0 0.0
        %258 = vmatprep.subr.mxu0 0.0
        %259 = vmatpush1.msra.mxu0 0.0
        %260 = vmatprep.subr.mxu0 0.0
        %261 = vmatpush1.msra.mxu0 0.0
        %262 = vmatprep.subr.mxu0 0.0
        %263 = vmatpush1.msra.mxu0 0.0
        %264 = vmatprep.subr.mxu0 0.0
        %265 = vmatpush1.msra.mxu0 0.0
        %266 = vmatprep.subr.mxu0 0.0
        %267 = vmatpush1.msra.mxu0 0.0
        %268 = vmatprep.subr.mxu0 0.0
        %269 = vmatpush1.msra.mxu0 0.0
        %270 = vmatprep.subr.mxu0 0.0
        %271 = vmatpush1.msra.mxu0 0.0
        %272 = vmatprep.subr.mxu0 0.0
        %273 = vmatpush1.msra.mxu0 0.0
        %274 = vmatprep.subr.mxu0 0.0
        %275 = vmatpush1.msra.mxu0 0.0
        %276 = vmatprep.subr.mxu0 0.0
        %277 = vmatpush1.msra.mxu0 0.0
        %278 = vmatprep.subr.mxu0 0.0
        %279 = vmatpush1.msra.mxu0 0.0
        %280 = vmatprep.subr.mxu0 0.0
        %281 = vmatpush1.msra.mxu0 0.0
        %282 = vmatprep.subr.mxu0 0.0
        %283 = vmatpush1.msra.mxu0 0.0
        %284 = vmatprep.subr.mxu0 0.0
        %285 = vmatpush1.msra.mxu0 0.0
        %286 = vmatprep.subr.mxu0 0.0
        %287 = vmatpush1.msra.mxu0 0.0
        %288 = vmatprep.subr.mxu0 0.0
        %289 = vmatpush1.msra.mxu0 0.0
        %290 = vmatprep.subr.mxu0 0.0
        %291 = vmatpush1.msra.mxu0 0.0
        %292 = vmatprep.subr.mxu0 0.0
        %293 = vmatpush1.msra.mxu0 0.0
        %294 = vmatprep.subr.mxu0 0.0
        %295 = vmatpush1.msra.mxu0 0.0
        %296 = vmatprep.subr.mxu0 0.0
        %297 = vmatpush1.msra.mxu0 0.0
        %298 = vmatprep.mubr.f32.mxu0 0.0
        %299 = vmatmul.mubr.f32.gmra.mrb[0].mxu0 %v232
        %v300 = vpop.f32.mrb[0].mxu0
        %v301 = vadd.f32 0.0, %v300
        %v302 = vpop.f32.mrb[0].mxu0
        %303 = vdwg.mxu0
        %v305 = vsel %vm230, %v225, 0
        %307 = vmatprep.subr.mxu0 0.0
        %308 = vmatpush1.msra.mxu0 %v228
        %309 = vmatprep.subr.mxu0 0.0
        %310 = vmatpush1.msra.mxu0 %v229
        %311 = vmatprep.subr.mxu0 0.0
        %312 = vmatpush1.msra.mxu0 0.0
        %313 = vmatprep.subr.mxu0 0.0
        %314 = vmatpush1.msra.mxu0 0.0
        %315 = vmatprep.subr.mxu0 0.0
        %316 = vmatpush1.msra.mxu0 0.0
        %317 = vmatprep.subr.mxu0 0.0
        %318 = vmatpush1.msra.mxu0 0.0
        %319 = vmatprep.subr.mxu0 0.0
        %320 = vmatpush1.msra.mxu0 0.0
        %321 = vmatprep.subr.mxu0 0.0
        %322 = vmatpush1.msra.mxu0 0.0
        %323 = vmatprep.subr.mxu0 0.0
        %324 = vmatpush1.msra.mxu0 0.0
        %325 = vmatprep.subr.mxu0 0.0
        %326 = vmatpush1.msra.mxu0 0.0
        %327 = vmatprep.subr.mxu0 0.0
        %328 = vmatpush1.msra.mxu0 0.0
        %329 = vmatprep.subr.mxu0 0.0
        %330 = vmatpush1.msra.mxu0 0.0
        %331 = vmatprep.subr.mxu0 0.0
        %332 = vmatpush1.msra.mxu0 0.0
        %333 = vmatprep.subr.mxu0 0.0
        %334 = vmatpush1.msra.mxu0 0.0
        %335 = vmatprep.subr.mxu0 0.0
        %336 = vmatpush1.msra.mxu0 0.0
        %337 = vmatprep.subr.mxu0 0.0
        %338 = vmatpush1.msra.mxu0 0.0
        %339 = vmatprep.subr.mxu0 0.0
        %340 = vmatpush1.msra.mxu0 0.0
        %341 = vmatprep.subr.mxu0 0.0
        %342 = vmatpush1.msra.mxu0 0.0
        %343 = vmatprep.subr.mxu0 0.0
        %344 = vmatpush1.msra.mxu0 0.0
        %345 = vmatprep.subr.mxu0 0.0
        %346 = vmatpush1.msra.mxu0 0.0
        %347 = vmatprep.subr.mxu0 0.0
        %348 = vmatpush1.msra.mxu0 0.0
        %349 = vmatprep.subr.mxu0 0.0
        %350 = vmatpush1.msra.mxu0 0.0
        %351 = vmatprep.subr.mxu0 0.0
        %352 = vmatpush1.msra.mxu0 0.0
        %353 = vmatprep.subr.mxu0 0.0
        %354 = vmatpush1.msra.mxu0 0.0
        %355 = vmatprep.subr.mxu0 0.0
        %356 = vmatpush1.msra.mxu0 0.0
        %357 = vmatprep.subr.mxu0 0.0
        %358 = vmatpush1.msra.mxu0 0.0
        %359 = vmatprep.subr.mxu0 0.0
        %360 = vmatpush1.msra.mxu0 0.0
        %361 = vmatprep.subr.mxu0 0.0
        %362 = vmatpush1.msra.mxu0 0.0
        %363 = vmatprep.subr.mxu0 0.0
        %364 = vmatpush1.msra.mxu0 0.0
        %365 = vmatprep.subr.mxu0 0.0
        %366 = vmatpush1.msra.mxu0 0.0
        %367 = vmatprep.subr.mxu0 0.0
        %368 = vmatpush1.msra.mxu0 0.0
        %369 = vmatprep.subr.mxu0 0.0
        %370 = vmatpush1.msra.mxu0 0.0
        %371 = vmatprep.mubr.f32.mxu0 0.0
        %372 = vmatmul.mubr.f32.gmra.mrb[0].mxu0 %v305
        %v373 = vpop.f32.mrb[0].mxu0
        %v374 = vadd.f32 0.0, %v373
        %v375 = vpop.f32.mrb[0].mxu0
        %376 = vdwg.mxu0
        %377 = vst [vmem:[%s178] sm:$0xf] %v301
        %378 = vst [vmem:[%s178 + $0x4] sm:$0xf] %v374
        %s379 = sand.u32 %s79, 1
        %s380 = scalar_lea.sflag [#allocation4], %s379
        %s381 = sand.u32 %s79, 1
        %s382 = smul.addr %s381, 8
        %s383 = scalar_lea.vmem [#allocation5], %s382
        // Predicated region
        $region33: #{tpu_custom_call.1} parent=27 // pred_check
          %p384 = pneg %p89
        $region34: #{tpu_custom_call.1} parent=27 // pred_check_branch
          %386 = sbr.rel (%p384) target = $region36
        $region35: #{tpu_custom_call.1} parent=27 // pred_region
          %s387 = smul.u32 2, %s19
          %s389 = ssub.s32 128, 128
          %390 = vsyncadd %s380, %s389
          %s391 = smul.addr %s387, 64
          %s392 = scalar_lea.hbm %s2, %s391
          %s393 = sshll.u32 %s383, 4
          %s394 = int_to_ptr.vmem [resolvable:$true] %s393
          %399 = dma.vmem_to_hbm [thread:$0]  %s394, 128, %s392, %s380, 64, 64, 4
        $region36: #{tpu_custom_call.1} parent=27 // pred_fallthru
          _
      $region28: #{tpu_custom_call.1} parent=5 // pred_fallthru
        _
      %p400 = scmp.le.s32.totalorder 2, %s14
      // Predicated region
      $region37: #{tpu_custom_call.1} parent=5 // pred_check
        %p401 = pneg %p400
      $region38: #{tpu_custom_call.1} parent=5 // pred_check_branch
        %403 = sbr.rel (%p401) target = $region40
      $region39: #{tpu_custom_call.1} parent=5 // pred_region
        %s404 = ssub.s32 %s14, 2
        // Predicated region
        $region41: #{tpu_custom_call.1} parent=39 // pred_check
          %p405 = pneg %p95
        $region42: #{tpu_custom_call.1} parent=39 // pred_check_branch
          %407 = sbr.rel (%p405) target = $region44
        $region43: #{tpu_custom_call.1} parent=39 // pred_region
          %s408 = sand.u32 %s80, 1
          %s409 = scalar_lea.sflag [#allocation4], %s408
          %s410 = sand.u32 %s80, 1
          %s411 = smul.addr %s410, 8
          %s412 = scalar_lea.vmem [#allocation5], %s411
          %413 = dma.done %s409, 128
        $region44: #{tpu_custom_call.1} parent=39 // pred_fallthru
          _
      $region40: #{tpu_custom_call.1} parent=5 // pred_fallthru
        _
    $region6: #{tpu_custom_call.1} parent=1 // loop_footer
      %s18 = sadd.s32 1, %s14
    $region7: #{tpu_custom_call.1} parent=1 // loop_footer_branch
      %13 = sbr.rel target = $region3
    $region8: #{tpu_custom_call.1} parent=1 // loop_exit
      _
    %414 = vsyncpa [#allocation3], 1
    %s415 = scalar_lea.sflag [#allocation3], 1
    %416 = vsyncpa %s415, 1
    %417 = vsyncpa [#allocation4], 1
    %s418 = scalar_lea.sflag [#allocation4], 1
    %419 = vsyncpa %s418, 1

</llo_original>
